<compile_context>
chip_gen: v7x
topology: tpu7x:2x2x1
jax: 0.10.0
libtpu: 0.0.40
codegen_flags: <defaults>
</compile_context>

<pallas_src>
import jax
import jax.numpy as jnp
from jax.experimental import pallas as pl
from jax.experimental.pallas import tpu as pltpu

LANE = 128
BLOCK_ROWS = 4096            # (4096, 128) f32 = 2 MiB per input block
SMOOTH = 1e-05
VMEM_LIMIT_BYTES = 48 * 1024 * 1024   # double-buffered inputs + intermediates


def _combo_partial_kernel(dims_ref, x_ref, t_ref, o_ref):
    """Per-block partial sums.

    Output block (1, 4, 128): sublanes are [bce_sum, intersection, p_sum, t_sum],
    each still lane-resolved; the single cross-lane reduce of the tiny
    (grid, 4, 128) result happens once in the wrapper.
    """
    block_rows, lane = x_ref.shape
    base = pl.program_id(0) * block_rows
    full_rows = dims_ref[0]          # n // 128
    tail = dims_ref[1]               # n % 128

    def emit(valid):
        x = x_ref[...].astype(jnp.float32)
        t = t_ref[...].astype(jnp.float32)
        # Shared transcendental: e = exp(-|x|) feeds both the stable BCE log
        # term and the stable sigmoid.
        e = jnp.exp(-jnp.abs(x))
        bce = jnp.maximum(x, 0.0) - x * t + jnp.log1p(e)
        inv = pl.reciprocal(1.0 + e, approx=True)        # EUP vrcp, free slot
        p = jnp.where(x >= 0.0, inv, e * inv)             # sigmoid(x)
        if valid is not None:
            # Masked (last) block only.  Use selects so any NaN garbage in the
            # padded / partial-block region cannot propagate into the sums.
            zero = jnp.zeros_like(bce)
            bce = jnp.where(valid, bce, zero)
            p = jnp.where(valid, p, zero)
            t = jnp.where(valid, t, zero)
        # Sublane-axis reductions (VPU); direct sublane stores, no concatenate.
        o_ref[0, 0:1, :] = jnp.sum(bce, axis=0, keepdims=True)
        o_ref[0, 1:2, :] = jnp.sum(p * t, axis=0, keepdims=True)
        o_ref[0, 2:3, :] = jnp.sum(p, axis=0, keepdims=True)
        o_ref[0, 3:4, :] = jnp.sum(t, axis=0, keepdims=True)

    # A block is fully valid iff every one of its rows is a fully-populated row.
    fully_valid = (base + block_rows) <= full_rows

    @pl.when(fully_valid)
    def _():
        emit(None)                                        # mask-free fast path

    @pl.when(jnp.logical_not(fully_valid))
    def _():
        ridx = base + jax.lax.broadcasted_iota(jnp.int32, (block_rows, lane), 0)
        lidx = jax.lax.broadcasted_iota(jnp.int32, (block_rows, lane), 1)
        valid = (ridx < full_rows) | ((ridx == full_rows) & (lidx < tail))
        emit(valid)


def combo_loss(inputs, targets, bce_weight=1.0, dice_weight=1.0,
               block_rows=BLOCK_ROWS):
    """JAX wrapper matching ComboLoss.forward (BCEWithLogits mean + Dice)."""
    assert inputs.shape == targets.shape
    n = int(inputs.size)
    assert n > 0

    x = inputs.reshape(-1)
    t = targets.reshape(-1)

    rows = pl.cdiv(n, LANE)
    pad = rows * LANE - n
    if pad:  # only the ragged case pays for a pad; n % 128 == 0 is a pure reshape
        x = jnp.pad(x, (0, pad))
        t = jnp.pad(t, (0, pad))
    x = x.reshape(rows, LANE)
    t = t.reshape(rows, LANE)

    # Pick the block row count.  Keep it sublane-aligned (multiple of 8) unless
    # it spans the full array, and keep grid >= 2 for reasonably-sized inputs so
    # the "parallel" grid axis can shard across both TensorCores on v7x.
    if rows <= block_rows:
        br = rows
        if rows >= 16:
            br = ((pl.cdiv(rows, 2) + 7) // 8) * 8
    else:
        br = ((min(block_rows, rows) + 7) // 8) * 8
    br = min(br, rows)
    grid = pl.cdiv(rows, br)

    dims = jnp.array([n // LANE, n % LANE], dtype=jnp.int32)

    grid_spec = pltpu.PrefetchScalarGridSpec(
        num_scalar_prefetch=1,
        grid=(grid,),
        in_specs=[
            pl.BlockSpec((br, LANE), lambda i, dims_ref: (i, 0)),
            pl.BlockSpec((br, LANE), lambda i, dims_ref: (i, 0)),
        ],
        out_specs=pl.BlockSpec((1, 4, LANE), lambda i, dims_ref: (i, 0, 0)),
    )

    partials = pl.pallas_call(
        _combo_partial_kernel,
        out_shape=jax.ShapeDtypeStruct((grid, 4, LANE), jnp.float32),
        grid_spec=grid_spec,
        compiler_params=pltpu.CompilerParams(
            dimension_semantics=("parallel",),
            vmem_limit_bytes=VMEM_LIMIT_BYTES),
    )(dims, x, t)

    sums = jnp.sum(partials, axis=(0, 2))  # (4,): bce_sum, inter, p_sum, t_sum
    bce_mean = sums[0] / jnp.float32(n)
    dice_loss = 1.0 - (2.0 * sums[1] + SMOOTH) / (sums[2] + sums[3] + SMOOTH)
    return bce_weight * bce_mean + dice_weight * dice_loss


def _combo_loss_ref(inputs, targets, bce_weight=1.0, dice_weight=1.0):
    """Pure-JAX reference mirroring the PyTorch module, for correctness checks."""
    x = inputs.reshape(-1).astype(jnp.float32)
    t = targets.reshape(-1).astype(jnp.float32)
    bce = jnp.mean(jnp.maximum(x, 0.0) - x * t + jnp.log1p(jnp.exp(-jnp.abs(x))))
    p = jax.nn.sigmoid(x)
    inter = jnp.sum(p * t)
    dice = 1.0 - (2.0 * inter + SMOOTH) / (jnp.sum(p) + jnp.sum(t) + SMOOTH)
    return bce_weight * bce + dice_weight * dice


if __name__ == "__main__":
    key = jax.random.PRNGKey(0)
    k1, k2, k3, k4 = jax.random.split(key, 4)

    # Segmentation-head-like NCHW logits and binary targets (divisible case;
    # rows=16 -> the wrapper splits into 2 fully-valid blocks, fast path only).
    x = jax.random.normal(k1, (2, 4, 16, 16), dtype=jnp.float32)
    t = (jax.random.uniform(k2, (2, 4, 16, 16)) > 0.5).astype(jnp.float32)
    loss = combo_loss(x, t, bce_weight=1.0, dice_weight=1.0)
    jax.block_until_ready(loss)
    ref = _combo_loss_ref(x, t, 1.0, 1.0)
    # Tolerance loosened for the approx (EUP) reciprocal in sigmoid.
    assert jnp.allclose(loss, ref, atol=5e-3, rtol=5e-3), (loss, ref)

    # Ragged size + multi-block grid (exercises the masked partial last block
    # and the mask-free fast path on the earlier blocks).
    x2 = jax.random.normal(k3, (2, 3, 17, 33), dtype=jnp.float32)
    t2 = (jax.random.uniform(k4, (2, 3, 17, 33)) > 0.5).astype(jnp.float32)
    loss2 = combo_loss(x2, t2, bce_weight=0.7, dice_weight=1.3, block_rows=8)
    jax.block_until_ready(loss2)
    ref2 = _combo_loss_ref(x2, t2, 0.7, 1.3)
    assert jnp.allclose(loss2, ref2, atol=5e-3, rtol=5e-3), (loss2, ref2)

    # bf16 inputs (bandwidth-optimized path): kernel upcasts to f32 in-register.
    xb = x.astype(jnp.bfloat16)
    tb = t.astype(jnp.bfloat16)
    loss3 = combo_loss(xb, tb, bce_weight=1.0, dice_weight=1.0)
    jax.block_until_ready(loss3)
    ref3 = _combo_loss_ref(xb, tb, 1.0, 1.0)
    assert jnp.allclose(loss3, ref3, atol=1e-2, rtol=1e-2), (loss3, ref3)

    print("KERNEL_OK")
</pallas_src>

<mosaic_0001>
module attributes {stable_mosaic.version = 11 : i64} {
  func.func @_combo_partial_kernel(%arg0: i32, %arg1: memref<2xi32, #tpu.memory_space<smem>>, %arg2: memref<8x128xf32, #tpu.memory_space<vmem>>, %arg3: memref<8x128xf32, #tpu.memory_space<vmem>>, %arg4: memref<1x4x128xf32, #tpu.memory_space<vmem>>) attributes {dimension_semantics = [#tpu.dimension_semantics<parallel>], iteration_bounds = array<i64: 2>, scalar_prefetch = 1 : i64, scratch_operands = 0 : i64, tpu.core_type = #tpu.core_type<tc>, window_params = [{transform_indices = @transform_0, window_bounds = array<i64: 8, 128>}, {transform_indices = @transform_1, window_bounds = array<i64: 8, 128>}, {transform_indices = @transform_2, window_bounds = array<i64: 1, 4, 128>}]} {
    %c8_i32 = arith.constant 8 : i32
    %0 = arith.muli %arg0, %c8_i32 : i32
    %c0 = arith.constant 0 : index
    %1 = memref.load %arg1[%c0] : memref<2xi32, #tpu.memory_space<smem>>
    %c1 = arith.constant 1 : index
    %2 = memref.load %arg1[%c1] : memref<2xi32, #tpu.memory_space<smem>>
    %c8_i32_0 = arith.constant 8 : i32
    %3 = arith.addi %0, %c8_i32_0 : i32
    %4 = arith.cmpi sle, %3, %1 : i32
    %5 = arith.extui %4 : i1 to i32
    %c0_i32 = arith.constant 0 : i32
    %6 = arith.cmpi ne, %5, %c0_i32 : i32
    scf.if %6 {
      %c0_2 = arith.constant 0 : index
      %c0_3 = arith.constant 0 : index
      %10 = vector.load %arg2[%c0_2, %c0_3] : memref<8x128xf32, #tpu.memory_space<vmem>>, vector<8x128xf32>
      %c0_4 = arith.constant 0 : index
      %c0_5 = arith.constant 0 : index
      %11 = vector.load %arg3[%c0_4, %c0_5] : memref<8x128xf32, #tpu.memory_space<vmem>>, vector<8x128xf32>
      %12 = math.absf %10 : vector<8x128xf32>
      %cst = arith.constant 0.000000e+00 : f32
      %13 = vector.broadcast %cst : f32 to vector<8x128xf32>
      %14 = arith.subf %13, %12 : vector<8x128xf32>
      %15 = math.exp %14 : vector<8x128xf32>
      %cst_6 = arith.constant 0.000000e+00 : f32
      %16 = vector.broadcast %cst_6 : f32 to vector<8x128xf32>
      %17 = arith.maximumf %10, %16 : vector<8x128xf32>
      %18 = arith.mulf %10, %11 : vector<8x128xf32>
      %19 = arith.subf %17, %18 : vector<8x128xf32>
      %20 = math.log1p %15 : vector<8x128xf32>
      %21 = arith.addf %19, %20 : vector<8x128xf32>
      %cst_7 = arith.constant 1.000000e+00 : f32
      %22 = vector.broadcast %cst_7 : f32 to vector<8x128xf32>
      %23 = arith.addf %22, %15 : vector<8x128xf32>
      %24 = tpu.reciprocal %23 {approx = true} : vector<8x128xf32> -> vector<8x128xf32>
      %cst_8 = arith.constant 0.000000e+00 : f32
      %25 = vector.broadcast %cst_8 : f32 to vector<8x128xf32>
      %26 = arith.cmpf oge, %10, %25 : vector<8x128xf32>
      %27 = arith.mulf %15, %24 : vector<8x128xf32>
      %28 = arith.select %26, %24, %27 : vector<8x128xi1>, vector<8x128xf32>
      %cst_9 = arith.constant dense<0.000000e+00> : vector<128xf32>
      %29 = vector.multi_reduction <add>, %21, %cst_9 [0] : vector<8x128xf32> to vector<128xf32>
      %30 = vector.shape_cast %29 : vector<128xf32> to vector<1x128xf32>
      %c0_10 = arith.constant 0 : index
      %c0_11 = arith.constant 0 : index
      %c0_12 = arith.constant 0 : index
      %31 = vector.load %arg4[%c0_10, %c0_11, %c0_12] : memref<1x4x128xf32, #tpu.memory_space<vmem>>, vector<1x1x128xf32>
      %32 = vector.shape_cast %31 : vector<1x1x128xf32> to vector<1x128xf32>
      %33 = vector.shape_cast %30 : vector<1x128xf32> to vector<1x1x128xf32>
      tpu.vector_store %arg4[%c0_10, %c0_11, %c0_12], %33 {strides = array<i32>} : memref<1x4x128xf32, #tpu.memory_space<vmem>>, vector<1x1x128xf32>,
      %34 = arith.mulf %28, %11 : vector<8x128xf32>
      %cst_13 = arith.constant dense<0.000000e+00> : vector<128xf32>
      %35 = vector.multi_reduction <add>, %34, %cst_13 [0] : vector<8x128xf32> to vector<128xf32>
      %36 = vector.shape_cast %35 : vector<128xf32> to vector<1x128xf32>
      %c0_14 = arith.constant 0 : index
      %c1_15 = arith.constant 1 : index
      %c0_16 = arith.constant 0 : index
      %37 = vector.load %arg4[%c0_14, %c1_15, %c0_16] : memref<1x4x128xf32, #tpu.memory_space<vmem>>, vector<1x1x128xf32>
      %38 = vector.shape_cast %37 : vector<1x1x128xf32> to vector<1x128xf32>
      %39 = vector.shape_cast %36 : vector<1x128xf32> to vector<1x1x128xf32>
      tpu.vector_store %arg4[%c0_14, %c1_15, %c0_16], %39 {strides = array<i32>} : memref<1x4x128xf32, #tpu.memory_space<vmem>>, vector<1x1x128xf32>,
      %cst_17 = arith.constant dense<0.000000e+00> : vector<128xf32>
      %40 = vector.multi_reduction <add>, %28, %cst_17 [0] : vector<8x128xf32> to vector<128xf32>
      %41 = vector.shape_cast %40 : vector<128xf32> to vector<1x128xf32>
      %c0_18 = arith.constant 0 : index
      %c2 = arith.constant 2 : index
      %c0_19 = arith.constant 0 : index
      %42 = vector.load %arg4[%c0_18, %c2, %c0_19] : memref<1x4x128xf32, #tpu.memory_space<vmem>>, vector<1x1x128xf32>
      %43 = vector.shape_cast %42 : vector<1x1x128xf32> to vector<1x128xf32>
      %44 = vector.shape_cast %41 : vector<1x128xf32> to vector<1x1x128xf32>
      tpu.vector_store %arg4[%c0_18, %c2, %c0_19], %44 {strides = array<i32>} : memref<1x4x128xf32, #tpu.memory_space<vmem>>, vector<1x1x128xf32>,
      %cst_20 = arith.constant dense<0.000000e+00> : vector<128xf32>
      %45 = vector.multi_reduction <add>, %11, %cst_20 [0] : vector<8x128xf32> to vector<128xf32>
      %46 = vector.shape_cast %45 : vector<128xf32> to vector<1x128xf32>
      %c0_21 = arith.constant 0 : index
      %c3 = arith.constant 3 : index
      %c0_22 = arith.constant 0 : index
      %47 = vector.load %arg4[%c0_21, %c3, %c0_22] : memref<1x4x128xf32, #tpu.memory_space<vmem>>, vector<1x1x128xf32>
      %48 = vector.shape_cast %47 : vector<1x1x128xf32> to vector<1x128xf32>
      %49 = vector.shape_cast %46 : vector<1x128xf32> to vector<1x1x128xf32>
      tpu.vector_store %arg4[%c0_21, %c3, %c0_22], %49 {strides = array<i32>} : memref<1x4x128xf32, #tpu.memory_space<vmem>>, vector<1x1x128xf32>,
    } else {
    }
    %true = arith.constant true
    %7 = arith.xori %4, %true : i1
    %8 = arith.extui %7 : i1 to i32
    %c0_i32_1 = arith.constant 0 : i32
    %9 = arith.cmpi ne, %8, %c0_i32_1 : i32
    scf.if %9 {
      %10 = tpu.iota {dimensions = array<i32: 0>} : vector<8x128xi32>
      %11 = vector.broadcast %0 : i32 to vector<8x128xi32>
      %12 = arith.addi %11, %10 : vector<8x128xi32>
      %13 = tpu.iota {dimensions = array<i32: 1>} : vector<8x128xi32>
      %14 = vector.broadcast %1 : i32 to vector<8x128xi32>
      %15 = arith.cmpi slt, %12, %14 : vector<8x128xi32>
      %16 = vector.broadcast %1 : i32 to vector<8x128xi32>
      %17 = arith.cmpi eq, %12, %16 : vector<8x128xi32>
      %18 = vector.broadcast %2 : i32 to vector<8x128xi32>
      %19 = arith.cmpi slt, %13, %18 : vector<8x128xi32>
      %20 = arith.andi %17, %19 : vector<8x128xi1>
      %21 = arith.ori %15, %20 : vector<8x128xi1>
      %c0_2 = arith.constant 0 : index
      %c0_3 = arith.constant 0 : index
      %22 = vector.load %arg2[%c0_2, %c0_3] : memref<8x128xf32, #tpu.memory_space<vmem>>, vector<8x128xf32>
      %c0_4 = arith.constant 0 : index
      %c0_5 = arith.constant 0 : index
      %23 = vector.load %arg3[%c0_4, %c0_5] : memref<8x128xf32, #tpu.memory_space<vmem>>, vector<8x128xf32>
      %24 = math.absf %22 : vector<8x128xf32>
      %cst = arith.constant 0.000000e+00 : f32
      %25 = vector.broadcast %cst : f32 to vector<8x128xf32>
      %26 = arith.subf %25, %24 : vector<8x128xf32>
      %27 = math.exp %26 : vector<8x128xf32>
      %cst_6 = arith.constant 0.000000e+00 : f32
      %28 = vector.broadcast %cst_6 : f32 to vector<8x128xf32>
      %29 = arith.maximumf %22, %28 : vector<8x128xf32>
      %30 = arith.mulf %22, %23 : vector<8x128xf32>
      %31 = arith.subf %29, %30 : vector<8x128xf32>
      %32 = math.log1p %27 : vector<8x128xf32>
      %33 = arith.addf %31, %32 : vector<8x128xf32>
      %cst_7 = arith.constant 1.000000e+00 : f32
      %34 = vector.broadcast %cst_7 : f32 to vector<8x128xf32>
      %35 = arith.addf %34, %27 : vector<8x128xf32>
      %36 = tpu.reciprocal %35 {approx = true} : vector<8x128xf32> -> vector<8x128xf32>
      %cst_8 = arith.constant 0.000000e+00 : f32
      %37 = vector.broadcast %cst_8 : f32 to vector<8x128xf32>
      %38 = arith.cmpf oge, %22, %37 : vector<8x128xf32>
      %39 = arith.mulf %27, %36 : vector<8x128xf32>
      %40 = arith.select %38, %36, %39 : vector<8x128xi1>, vector<8x128xf32>
      %cst_9 = arith.constant 0.000000e+00 : f32
      %41 = vector.broadcast %cst_9 : f32 to vector<8x128xf32>
      %42 = arith.select %21, %33, %41 : vector<8x128xi1>, vector<8x128xf32>
      %43 = arith.select %21, %40, %41 : vector<8x128xi1>, vector<8x128xf32>
      %44 = arith.select %21, %23, %41 : vector<8x128xi1>, vector<8x128xf32>
      %cst_10 = arith.constant dense<0.000000e+00> : vector<128xf32>
      %45 = vector.multi_reduction <add>, %42, %cst_10 [0] : vector<8x128xf32> to vector<128xf32>
      %46 = vector.shape_cast %45 : vector<128xf32> to vector<1x128xf32>
      %c0_11 = arith.constant 0 : index
      %c0_12 = arith.constant 0 : index
      %c0_13 = arith.constant 0 : index
      %47 = vector.load %arg4[%c0_11, %c0_12, %c0_13] : memref<1x4x128xf32, #tpu.memory_space<vmem>>, vector<1x1x128xf32>
      %48 = vector.shape_cast %47 : vector<1x1x128xf32> to vector<1x128xf32>
      %49 = vector.shape_cast %46 : vector<1x128xf32> to vector<1x1x128xf32>
      tpu.vector_store %arg4[%c0_11, %c0_12, %c0_13], %49 {strides = array<i32>} : memref<1x4x128xf32, #tpu.memory_space<vmem>>, vector<1x1x128xf32>,
      %50 = arith.mulf %43, %44 : vector<8x128xf32>
      %cst_14 = arith.constant dense<0.000000e+00> : vector<128xf32>
      %51 = vector.multi_reduction <add>, %50, %cst_14 [0] : vector<8x128xf32> to vector<128xf32>
      %52 = vector.shape_cast %51 : vector<128xf32> to vector<1x128xf32>
      %c0_15 = arith.constant 0 : index
      %c1_16 = arith.constant 1 : index
      %c0_17 = arith.constant 0 : index
      %53 = vector.load %arg4[%c0_15, %c1_16, %c0_17] : memref<1x4x128xf32, #tpu.memory_space<vmem>>, vector<1x1x128xf32>
      %54 = vector.shape_cast %53 : vector<1x1x128xf32> to vector<1x128xf32>
      %55 = vector.shape_cast %52 : vector<1x128xf32> to vector<1x1x128xf32>
      tpu.vector_store %arg4[%c0_15, %c1_16, %c0_17], %55 {strides = array<i32>} : memref<1x4x128xf32, #tpu.memory_space<vmem>>, vector<1x1x128xf32>,
      %cst_18 = arith.constant dense<0.000000e+00> : vector<128xf32>
      %56 = vector.multi_reduction <add>, %43, %cst_18 [0] : vector<8x128xf32> to vector<128xf32>
      %57 = vector.shape_cast %56 : vector<128xf32> to vector<1x128xf32>
      %c0_19 = arith.constant 0 : index
      %c2 = arith.constant 2 : index
      %c0_20 = arith.constant 0 : index
      %58 = vector.load %arg4[%c0_19, %c2, %c0_20] : memref<1x4x128xf32, #tpu.memory_space<vmem>>, vector<1x1x128xf32>
      %59 = vector.shape_cast %58 : vector<1x1x128xf32> to vector<1x128xf32>
      %60 = vector.shape_cast %57 : vector<1x128xf32> to vector<1x1x128xf32>
      tpu.vector_store %arg4[%c0_19, %c2, %c0_20], %60 {strides = array<i32>} : memref<1x4x128xf32, #tpu.memory_space<vmem>>, vector<1x1x128xf32>,
      %cst_21 = arith.constant dense<0.000000e+00> : vector<128xf32>
      %61 = vector.multi_reduction <add>, %44, %cst_21 [0] : vector<8x128xf32> to vector<128xf32>
      %62 = vector.shape_cast %61 : vector<128xf32> to vector<1x128xf32>
      %c0_22 = arith.constant 0 : index
      %c3 = arith.constant 3 : index
      %c0_23 = arith.constant 0 : index
      %63 = vector.load %arg4[%c0_22, %c3, %c0_23] : memref<1x4x128xf32, #tpu.memory_space<vmem>>, vector<1x1x128xf32>
      %64 = vector.shape_cast %63 : vector<1x1x128xf32> to vector<1x128xf32>
      %65 = vector.shape_cast %62 : vector<1x128xf32> to vector<1x1x128xf32>
      tpu.vector_store %arg4[%c0_22, %c3, %c0_23], %65 {strides = array<i32>} : memref<1x4x128xf32, #tpu.memory_space<vmem>>, vector<1x1x128xf32>,
    } else {
    }
    return
  }
  func.func @transform_0(%arg0: i32, %arg1: memref<2xi32, #tpu.memory_space<smem>>) -> (i32, i32) {
    %c0_i32 = arith.constant 0 : i32
    %c0_i32_0 = arith.constant 0 : i32
    return %arg0, %c0_i32 : i32, i32
  }
  func.func @transform_1(%arg0: i32, %arg1: memref<2xi32, #tpu.memory_space<smem>>) -> (i32, i32) {
    %c0_i32 = arith.constant 0 : i32
    %c0_i32_0 = arith.constant 0 : i32
    return %arg0, %c0_i32 : i32, i32
  }
  func.func @transform_2(%arg0: i32, %arg1: memref<2xi32, #tpu.memory_space<smem>>) -> (i32, i32, i32) {
    %c0_i32 = arith.constant 0 : i32
    %c0_i32_0 = arith.constant 0 : i32
    %c0_i32_1 = arith.constant 0 : i32
    return %arg0, %c0_i32, %c0_i32_0 : i32, i32, i32
  }
}

</mosaic_0001>

<llo_original>
// kernel: tpu_custom_call.1
$region0: #{tpu_custom_call.1}
  #allocation0 [shape = 'u32[]', space=smem, size = 0x4, offset = 0x4, fixed_abs, tag = 'smem constant byte address 0x4 - core index']
  #allocation1 [shape = 'u32[144,128]{1,0:T(1,128)}', space=vmem, size = 0x12000, scoped, tag = 'internal scratch']
  #allocation2 [shape = 's32[1]{0}', space=sflag, size = 0x4, scoped, tag = 'scoped memory for tpu_custom_call.1']
  #allocation3 [shape = 'u8[512]{0}', space=smem, size = 0x200, scoped, tag = 'prefetched SMEM operand 0']
  %s0 = inlined_call_operand.hbm [shape: s32[2], index: 0, kind: input, shape index: {}]
  %s1 = inlined_call_operand.hbm [shape: f32[16,128], index: 1, kind: input, shape index: {}]
  %s2 = inlined_call_operand.hbm [shape: f32[16,128], index: 2, kind: input, shape index: {}]
  %s3 = inlined_call_operand.hbm [shape: f32[2,4,128], index: 3, kind: output, shape index: {}]
  %s4 = sld [smem:[#allocation0]]
  $region57: #{tpu_custom_call.1} parent=0
    _
  %s6 = ssub.s32 1, %s4
  %s7 = scalar_select 0, %s6, %s4
  %9 = dma.hbm_to_smem %s0, 16, [#allocation3], [#allocation2]
  %10 = dma.done [#allocation2], 16
  %11 = sfence
  $region1: #{tpu_custom_call.1} parent=0
    #allocation4 [shape = 'u8[8192]{0}', space=vmem, size = 0x2000, scoped, tag = 'input window, operand 1']
    #allocation5 [shape = 's32[2]{0}', space=sflag, size = 0x8, scoped, tag = 'scoped memory for tpu_custom_call.1']
    #allocation6 [shape = 's32[2]{0}', space=sflag, size = 0x8, scoped, tag = 'scoped memory for tpu_custom_call.1']
    #allocation7 [shape = 'u8[8192]{0}', space=vmem, size = 0x2000, scoped, tag = 'input window, operand 2']
    #allocation8 [shape = 's32[2]{0}', space=sflag, size = 0x8, scoped, tag = 'scoped memory for tpu_custom_call.1']
    #allocation9 [shape = 'u8[4096]{0}', space=vmem, size = 0x1000, scoped, tag = 'output window, operand 0']
    %12 = vsyncpa [#allocation5], 0
    %s13 = scalar_lea.sflag [#allocation5], 1
    %14 = vsyncpa %s13, 0
    %15 = vsyncpa [#allocation8], 0
    %s16 = scalar_lea.sflag [#allocation8], 1
    %17 = vsyncpa %s16, 0
    %18 = vsyncpa [#allocation6], 0
    %s19 = scalar_lea.sflag [#allocation6], 1
    %20 = vsyncpa %s19, 0
    loop: start=0, step=1, limit=4
    $region2: #{tpu_custom_call.1} parent=1 // loop_pre_header
      _
    $region3: #{tpu_custom_call.1} parent=1 // loop_header
      %s22 = sphi 0, %s26
      %p23 = scmp.ge.s32.totalorder %s22, 4
      %s32 = sphi 0, %s34
      %s35 = sphi 0, %s32
      %s36 = sphi 0, %s35
      %s52 = sphi 0, %s36
      %s58 = sphi 0, %s60
      %s61 = sphi 0, %s58
      %s62 = sphi 0, %s61
      %s78 = sphi 0, %s62
      %s84 = sphi 0, %s86
      %s87 = sphi 0, %s84
      %s88 = sphi 0, %s87
      %s104 = sphi 0, %s88
    $region4: #{tpu_custom_call.1} parent=1 // loop_header_branch
      %25 = sbr.rel (%p23) target = $region8
    $region5: #{tpu_custom_call.1} parent=1 // loop_body
      %s27 = ssub.s32 %s22, 1
      %s28 = ssub.s32 %s22, 2
      %s29 = sadd.s32 %s22, 1
      %s30 = ssub.s32 %s22, %s29
      %p31 = scmp.eq.s32.totalorder %s30, 0
      %s33 = sadd.s32 %s32, 1
      %s34 = scalar_select %p31, %s32, %s33
      %p37 = pneg %p31
      %p38 = scmp.eq.s32.totalorder %s22, 1
      %p39 = por %p37, %p38
      %p40 = scmp.ne.s32.totalorder %s32, %s35
      %p41 = scmp.eq.s32.totalorder %s22, 0
      %p42 = por %p40, %p41
      %p43 = scmp.ne.s32.totalorder %s32, %s35
      %p44 = scmp.eq.s32.totalorder %s27, 1
      %p45 = por %p43, %p44
      %p46 = scmp.ne.s32.totalorder %s35, %s36
      %p47 = scmp.eq.s32.totalorder %s27, 0
      %p48 = por %p46, %p47
      %p49 = scmp.ne.s32.totalorder %s35, %s36
      %p50 = scmp.eq.s32.totalorder %s28, 1
      %p51 = por %p49, %p50
      %p53 = scmp.ne.s32.totalorder %s36, %s52
      %p54 = scmp.eq.s32.totalorder %s28, 0
      %p55 = por %p53, %p54
      %s56 = ssub.s32 %s22, %s29
      %p57 = scmp.eq.s32.totalorder %s56, 0
      %s59 = sadd.s32 %s58, 1
      %s60 = scalar_select %p57, %s58, %s59
      %p63 = pneg %p57
      %p64 = scmp.eq.s32.totalorder %s22, 1
      %p65 = por %p63, %p64
      %p66 = scmp.ne.s32.totalorder %s58, %s61
      %p67 = scmp.eq.s32.totalorder %s22, 0
      %p68 = por %p66, %p67
      %p69 = scmp.ne.s32.totalorder %s58, %s61
      %p70 = scmp.eq.s32.totalorder %s27, 1
      %p71 = por %p69, %p70
      %p72 = scmp.ne.s32.totalorder %s61, %s62
      %p73 = scmp.eq.s32.totalorder %s27, 0
      %p74 = por %p72, %p73
      %p75 = scmp.ne.s32.totalorder %s61, %s62
      %p76 = scmp.eq.s32.totalorder %s28, 1
      %p77 = por %p75, %p76
      %p79 = scmp.ne.s32.totalorder %s62, %s78
      %p80 = scmp.eq.s32.totalorder %s28, 0
      %p81 = por %p79, %p80
      %s82 = ssub.s32 %s22, %s29
      %p83 = scmp.eq.s32.totalorder %s82, 0
      %s85 = sadd.s32 %s84, 1
      %s86 = scalar_select %p83, %s84, %s85
      %p89 = pneg %p83
      %p90 = scmp.eq.s32.totalorder %s22, 1
      %p91 = por %p89, %p90
      %p92 = scmp.ne.s32.totalorder %s84, %s87
      %p93 = scmp.eq.s32.totalorder %s22, 0
      %p94 = por %p92, %p93
      %p95 = scmp.ne.s32.totalorder %s84, %s87
      %p96 = scmp.eq.s32.totalorder %s27, 1
      %p97 = por %p95, %p96
      %p98 = scmp.ne.s32.totalorder %s87, %s88
      %p99 = scmp.eq.s32.totalorder %s27, 0
      %p100 = por %p98, %p99
      %p101 = scmp.ne.s32.totalorder %s87, %s88
      %p102 = scmp.eq.s32.totalorder %s28, 1
      %p103 = por %p101, %p102
      %p105 = scmp.ne.s32.totalorder %s88, %s104
      %p106 = scmp.eq.s32.totalorder %s28, 0
      %p107 = por %p105, %p106
      %p108 = scmp.le.s32.totalorder 1, %s22
      %p109 = scmp.lt.s32.totalorder %s22, 3
      %p110 = pnand %p108, %p109
      %p111 = pneg %p110
      // Predicated region
      $region9: #{tpu_custom_call.1} parent=5 // pred_check
        _
      $region10: #{tpu_custom_call.1} parent=5 // pred_check_branch
        %113 = sbr.rel (%p110) target = $region12
      $region11: #{tpu_custom_call.1} parent=5 // pred_region
        %s114 = ssub.s32 %s22, 1
      $region12: #{tpu_custom_call.1} parent=5 // pred_fallthru
        _
      %p115 = scmp.lt.s32.totalorder %s22, 2
      // Predicated region
      $region13: #{tpu_custom_call.1} parent=5 // pred_check
        %p116 = pneg %p115
      $region14: #{tpu_custom_call.1} parent=5 // pred_check_branch
        %118 = sbr.rel (%p116) target = $region16
      $region15: #{tpu_custom_call.1} parent=5 // pred_region
        // Predicated region
        $region17: #{tpu_custom_call.1} parent=15 // pred_check
          %p119 = pneg %p42
        $region18: #{tpu_custom_call.1} parent=15 // pred_check_branch
          %121 = sbr.rel (%p119) target = $region20
        $region19: #{tpu_custom_call.1} parent=15 // pred_region
          %s122 = sand.u32 %s32, 1
          %s123 = scalar_lea.sflag [#allocation5], %s122
          %s124 = sand.u32 %s32, 1
          %s125 = smul.addr %s124, 8
          %s126 = scalar_lea.vmem [#allocation4], %s125
          %s128 = ssub.s32 128, 128
          %129 = vsyncadd %s123, %s128
          %s130 = smul.addr %s22, 128
          %s131 = scalar_lea.hbm %s1, %s130
          %s133 = sshll.u32 %s126, 4
          %s134 = int_to_ptr.vmem [resolvable:$true] %s133
          %136 = dma.hbm_to_vmem [thread:$0]  %s131, 128, %s134, %s123
        $region20: #{tpu_custom_call.1} parent=15 // pred_fallthru
          _
        // Predicated region
        $region21: #{tpu_custom_call.1} parent=15 // pred_check
          %p137 = pneg %p68
        $region22: #{tpu_custom_call.1} parent=15 // pred_check_branch
          %139 = sbr.rel (%p137) target = $region24
        $region23: #{tpu_custom_call.1} parent=15 // pred_region
          %s140 = sand.u32 %s58, 1
          %s141 = scalar_lea.sflag [#allocation8], %s140
          %s142 = sand.u32 %s58, 1
          %s143 = smul.addr %s142, 8
          %s144 = scalar_lea.vmem [#allocation7], %s143
          %s146 = ssub.s32 128, 128
          %147 = vsyncadd %s141, %s146
          %s148 = smul.addr %s22, 128
          %s149 = scalar_lea.hbm %s2, %s148
          %s151 = sshll.u32 %s144, 4
          %s152 = int_to_ptr.vmem [resolvable:$true] %s151
          %154 = dma.hbm_to_vmem [thread:$0]  %s149, 128, %s152, %s141
        $region24: #{tpu_custom_call.1} parent=15 // pred_fallthru
          _
      $region16: #{tpu_custom_call.1} parent=5 // pred_fallthru
        _
      %p155 = scmp.le.s32.totalorder 1, %s22
      %p156 = scmp.lt.s32.totalorder %s22, 3
      %p157 = pnand %p155, %p156
      %p158 = pneg %p157
      // Predicated region
      $region25: #{tpu_custom_call.1} parent=5 // pred_check
        _
      $region26: #{tpu_custom_call.1} parent=5 // pred_check_branch
        %160 = sbr.rel (%p157) target = $region28
      $region27: #{tpu_custom_call.1} parent=5 // pred_region
        %s161 = ssub.s32 %s22, 1
        %s162 = sand.u32 %s35, 1
        %s163 = scalar_lea.sflag [#allocation5], %s162
        %s164 = sand.u32 %s35, 1
        %s165 = smul.addr %s164, 8
        %s166 = scalar_lea.vmem [#allocation4], %s165
        // Predicated region
        $region29: #{tpu_custom_call.1} parent=27 // pred_check
          %p167 = pneg %p48
        $region30: #{tpu_custom_call.1} parent=27 // pred_check_branch
          %169 = sbr.rel (%p167) target = $region32
        $region31: #{tpu_custom_call.1} parent=27 // pred_region
          %170 = dma.done %s163, 128
        $region32: #{tpu_custom_call.1} parent=27 // pred_fallthru
          _
        %s171 = sand.u32 %s61, 1
        %s172 = scalar_lea.sflag [#allocation8], %s171
        %s173 = sand.u32 %s61, 1
        %s174 = smul.addr %s173, 8
        %s175 = scalar_lea.vmem [#allocation7], %s174
        // Predicated region
        $region33: #{tpu_custom_call.1} parent=27 // pred_check
          %p176 = pneg %p74
        $region34: #{tpu_custom_call.1} parent=27 // pred_check_branch
          %178 = sbr.rel (%p176) target = $region36
        $region35: #{tpu_custom_call.1} parent=27 // pred_region
          %179 = dma.done %s172, 128
        $region36: #{tpu_custom_call.1} parent=27 // pred_fallthru
          _
        %s180 = sand.u32 %s35, 1
        %s181 = scalar_lea.sflag [#allocation5], %s180
        %s182 = sand.u32 %s35, 1
        %s183 = smul.addr %s182, 8
        %s184 = scalar_lea.vmem [#allocation4], %s183
        %p185 = pneg %p48
        %p186 = pneg %p45
        %s187 = sand.u32 %s61, 1
        %s188 = scalar_lea.sflag [#allocation8], %s187
        %s189 = sand.u32 %s61, 1
        %s190 = smul.addr %s189, 8
        %s191 = scalar_lea.vmem [#allocation7], %s190
        %p192 = pneg %p74
        %p193 = pneg %p71
        %p194 = pneg %p100
        %p195 = pneg %p97
        %s196 = sand.u32 %s87, 1
        %s197 = scalar_lea.sflag [#allocation6], %s196
        %s198 = sand.u32 %s87, 1
        %s199 = smul.addr %s198, 4
        %s200 = scalar_lea.vmem [#allocation9], %s199
        %s201 = smul.u32 %s27, 8
        %s202 = sld [smem:[#allocation3]]
        %s203 = sld [smem:[#allocation3 + $0x1]]
        %s204 = sadd.s32 %s201, 8
        %p205 = scmp.le.s32.totalorder %s204, %s202
        // Predicated region
        $region37: #{tpu_custom_call.1} parent=27 // pred_check
          %p206 = pneg %p205
        $region38: #{tpu_custom_call.1} parent=27 // pred_check_branch
          %208 = sbr.rel (%p206) target = $region40
        $region39: #{tpu_custom_call.1} parent=27 // pred_region
          %v209 = vld [vmem:[%s166] sm:$0xff]
          %v210 = vld [vmem:[%s175] sm:$0xff]
          %v211 = vand.u32 2147483647, %v209
          %v212 = vsub.f32 0.0, %v211
          %v213 = vmul.f32 %v212, 1.442695
          %v214 = vpow.pop %v213
          %v215 = vmax.f32 %v209, 0.0
          %v216 = vmul.f32 %v209, %v210
          %v217 = vsub.f32 %v215, %v216
          %v218 = vadd.f32 %v214, 1.0
          %v219 = vlog2.pop %v218
          %v220 = vmul.f32 %v219, 0.6931472
          %v221 = vmul.f32 -0.5, %v214
          %v222 = vadd.f32 %v221, 1.0
          %v223 = vmul.f32 %v222, %v214
          %v224 = vand.u32 2147483647, %v214
          %vm225 = vcmp.lt.f32.partialorder %v224, 0.0004427343
          %v226 = vsel %vm225, %v223, %v220
          %v227 = vadd.f32 %v217, %v226
          %v228 = vadd.f32 %v214, 1.0
          %v229 = vrcp.pop %v228
          %vm230 = vcmp.ge.f32.partialorder %v209, 0.0
          %v231 = vmul.f32 %v214, %v229
          %v232 = vsel %vm230, %v229, %v231
          %v233 = vrot.slane %v227, 4
          %v234 = vadd.f32 %v227, %v233
          %v235 = vrot.slane %v234, 2
          %v236 = vadd.f32 %v234, %v235
          %v237 = vrot.slane %v236, 1
          %v238 = vadd.f32 %v236, %v237
          %239 = vst [vmem:[%s200] sm:$0x1] %v238
          %v240 = vmul.f32 %v232, %v210
          %v241 = vrot.slane %v240, 4
          %v242 = vadd.f32 %v240, %v241
          %v243 = vrot.slane %v242, 2
          %v244 = vadd.f32 %v242, %v243
          %v245 = vrot.slane %v244, 1
          %v246 = vadd.f32 %v244, %v245
          %247 = vst [vmem:[%s200 + $0x1] sm:$0x1] %v246
          %v248 = vrot.slane %v232, 4
          %v249 = vadd.f32 %v232, %v248
          %v250 = vrot.slane %v249, 2
          %v251 = vadd.f32 %v249, %v250
          %v252 = vrot.slane %v251, 1
          %v253 = vadd.f32 %v251, %v252
          %254 = vst [vmem:[%s200 + $0x2] sm:$0x1] %v253
          %v255 = vrot.slane %v210, 4
          %v256 = vadd.f32 %v210, %v255
          %v257 = vrot.slane %v256, 2
          %v258 = vadd.f32 %v256, %v257
          %v259 = vrot.slane %v258, 1
          %v260 = vadd.f32 %v258, %v259
          %261 = vst [vmem:[%s200 + $0x3] sm:$0x1] %v260
        $region40: #{tpu_custom_call.1} parent=27 // pred_fallthru
          _
        %p262 = scmp.gt.s32.totalorder %s204, %s202
        // Predicated region
        $region41: #{tpu_custom_call.1} parent=27 // pred_check
          %p263 = pneg %p262
        $region42: #{tpu_custom_call.1} parent=27 // pred_check_branch
          %265 = sbr.rel (%p263) target = $region44
        $region43: #{tpu_custom_call.1} parent=27 // pred_region
          %v266 = vlaneseq
          %v267 = vshrl.u32 %v266, 7
          %v268 = vstv %s201
          %v269 = vadd.s32 %v268, %v267
          %v270 = vlaneseq
          %v271 = vand.u32 %v270, 127
          %v272 = vstv %s202
          %vm273 = vcmp.lt.s32.totalorder %v269, %v272
          %vm274 = vcmp.eq.s32.totalorder %v269, %v272
          %v275 = vstv %s203
          %vm276 = vcmp.lt.s32.totalorder %v271, %v275
          %vm277 = vmand %vm274, %vm276
          %vm278 = vmor %vm273, %vm277
          %v279 = vld [vmem:[%s166] sm:$0xff]
          %v280 = vld [vmem:[%s175] sm:$0xff]
          %v281 = vand.u32 2147483647, %v279
          %v282 = vsub.f32 0.0, %v281
          %v283 = vmul.f32 %v282, 1.442695
          %v284 = vpow.pop %v283
          %v285 = vmax.f32 %v279, 0.0
          %v286 = vmul.f32 %v279, %v280
          %v287 = vsub.f32 %v285, %v286
          %v288 = vadd.f32 %v284, 1.0
          %v289 = vlog2.pop %v288
          %v290 = vmul.f32 %v289, 0.6931472
          %v291 = vmul.f32 -0.5, %v284
          %v292 = vadd.f32 %v291, 1.0
          %v293 = vmul.f32 %v292, %v284
          %v294 = vand.u32 2147483647, %v284
          %vm295 = vcmp.lt.f32.partialorder %v294, 0.0004427343
          %v296 = vsel %vm295, %v293, %v290
          %v297 = vadd.f32 %v287, %v296
          %v298 = vadd.f32 %v284, 1.0
          %v299 = vrcp.pop %v298
          %vm300 = vcmp.ge.f32.partialorder %v279, 0.0
          %v301 = vmul.f32 %v284, %v299
          %v302 = vsel %vm300, %v299, %v301
          %v303 = vsel %vm278, %v297, 0.0
          %v304 = vsel %vm278, %v302, 0.0
          %v305 = vsel %vm278, %v280, 0.0
          %v306 = vrot.slane %v303, 4
          %v307 = vadd.f32 %v303, %v306
          %v308 = vrot.slane %v307, 2
          %v309 = vadd.f32 %v307, %v308
          %v310 = vrot.slane %v309, 1
          %v311 = vadd.f32 %v309, %v310
          %312 = vst [vmem:[%s200] sm:$0x1] %v311
          %v313 = vmul.f32 %v304, %v305
          %v314 = vrot.slane %v313, 4
          %v315 = vadd.f32 %v313, %v314
          %v316 = vrot.slane %v315, 2
          %v317 = vadd.f32 %v315, %v316
          %v318 = vrot.slane %v317, 1
          %v319 = vadd.f32 %v317, %v318
          %320 = vst [vmem:[%s200 + $0x1] sm:$0x1] %v319
          %v321 = vrot.slane %v304, 4
          %v322 = vadd.f32 %v304, %v321
          %v323 = vrot.slane %v322, 2
          %v324 = vadd.f32 %v322, %v323
          %v325 = vrot.slane %v324, 1
          %v326 = vadd.f32 %v324, %v325
          %327 = vst [vmem:[%s200 + $0x2] sm:$0x1] %v326
          %v328 = vrot.slane %v305, 4
          %v329 = vadd.f32 %v305, %v328
          %v330 = vrot.slane %v329, 2
          %v331 = vadd.f32 %v329, %v330
          %v332 = vrot.slane %v331, 1
          %v333 = vadd.f32 %v331, %v332
          %334 = vst [vmem:[%s200 + $0x3] sm:$0x1] %v333
        $region44: #{tpu_custom_call.1} parent=27 // pred_fallthru
          _
        %s335 = sand.u32 %s87, 1
        %s336 = scalar_lea.sflag [#allocation6], %s335
        %s337 = sand.u32 %s87, 1
        %s338 = smul.addr %s337, 4
        %s339 = scalar_lea.vmem [#allocation9], %s338
        // Predicated region
        $region45: #{tpu_custom_call.1} parent=27 // pred_check
          %p340 = pneg %p97
        $region46: #{tpu_custom_call.1} parent=27 // pred_check_branch
          %342 = sbr.rel (%p340) target = $region48
        $region47: #{tpu_custom_call.1} parent=27 // pred_region
          %s344 = ssub.s32 64, 64
          %345 = vsyncadd %s336, %s344
          %s346 = smul.addr %s27, 64
          %s347 = scalar_lea.hbm %s3, %s346
          %s349 = sshll.u32 %s339, 4
          %s350 = int_to_ptr.vmem [resolvable:$true] %s349
          %352 = dma.vmem_to_hbm [thread:$0]  %s350, 64, %s347, %s336
        $region48: #{tpu_custom_call.1} parent=27 // pred_fallthru
          _
      $region28: #{tpu_custom_call.1} parent=5 // pred_fallthru
        _
      %p353 = scmp.le.s32.totalorder 2, %s22
      // Predicated region
      $region49: #{tpu_custom_call.1} parent=5 // pred_check
        %p354 = pneg %p353
      $region50: #{tpu_custom_call.1} parent=5 // pred_check_branch
        %356 = sbr.rel (%p354) target = $region52
      $region51: #{tpu_custom_call.1} parent=5 // pred_region
        %s357 = ssub.s32 %s22, 2
        // Predicated region
        $region53: #{tpu_custom_call.1} parent=51 // pred_check
          %p358 = pneg %p103
        $region54: #{tpu_custom_call.1} parent=51 // pred_check_branch
          %360 = sbr.rel (%p358) target = $region56
        $region55: #{tpu_custom_call.1} parent=51 // pred_region
          %s361 = sand.u32 %s88, 1
          %s362 = scalar_lea.sflag [#allocation6], %s361
          %s363 = sand.u32 %s88, 1
          %s364 = smul.addr %s363, 4
          %s365 = scalar_lea.vmem [#allocation9], %s364
          %366 = dma.done %s362, 64
        $region56: #{tpu_custom_call.1} parent=51 // pred_fallthru
          _
      $region52: #{tpu_custom_call.1} parent=5 // pred_fallthru
        _
    $region6: #{tpu_custom_call.1} parent=1 // loop_footer
      %s26 = sadd.s32 1, %s22
    $region7: #{tpu_custom_call.1} parent=1 // loop_footer_branch
      %21 = sbr.rel target = $region3
    $region8: #{tpu_custom_call.1} parent=1 // loop_exit
      _
    %367 = vsyncpa [#allocation5], 1
    %s368 = scalar_lea.sflag [#allocation5], 1
    %369 = vsyncpa %s368, 1
    %370 = vsyncpa [#allocation8], 1
    %s371 = scalar_lea.sflag [#allocation8], 1
    %372 = vsyncpa %s371, 1
    %373 = vsyncpa [#allocation6], 1
    %s374 = scalar_lea.sflag [#allocation6], 1
    %375 = vsyncpa %s374, 1

</llo_original>
